<compile_context>
chip_gen: v5e
topology: v5e:2x2
jax: 0.10.0
libtpu: 0.0.40
codegen_flags: <defaults>
</compile_context>

<pallas_src>
import functools

import jax
import jax.numpy as jnp
from jax.experimental import pallas as pl
from jax.experimental.pallas import tpu as pltpu


_BIG = 1.0e30   # sentinel "infinite" (half) squared distance for padded points
_K_AUG = 8      # augmented contraction dim: [coords(3), norm, one, zero pad(3)]


def _round_up(x, m):
    return ((x + m - 1) // m) * m


def _default_tiling():
    """(tile_m, tile_n, batch_fold_bytes) picked from the local VMEM size."""
    vmem = 64 << 20
    try:
        vmem = int(getattr(pltpu.get_tpu_info(), "vmem_capacity_bytes", vmem))
    except Exception:
        pass
    if vmem >= (96 << 20):           # v5e / v6e: 128 MiB VMEM -> larger tiles
        return 512, 1024, (16 << 20)
    return 512, 512, (4 << 20)       # v7x: 64 MiB VMEM -> conservative


def _augment_lhs(x, n_pad):
    """gts (B, N, D) -> (B, n_pad, 8) with columns [-x, 0.5||x||^2, 1, 0...].

    Padded rows are all-zero except a _BIG norm entry, so every distance
    involving them is >= _BIG and they never win a min.
    """
    bs, n, d = x.shape
    xn = 0.5 * jnp.sum(x * x, axis=-1, keepdims=True)
    ones = jnp.ones((bs, n, 1), x.dtype)
    zeros = jnp.zeros((bs, n, _K_AUG - (d + 2)), x.dtype)
    a = jnp.concatenate([-x, xn, ones, zeros], axis=-1)
    if n_pad > n:
        pad_row = jnp.zeros((_K_AUG,), x.dtype).at[d].set(_BIG)
        a = jnp.concatenate(
            [a, jnp.broadcast_to(pad_row, (bs, n_pad - n, _K_AUG))], axis=1)
    return a


def _augment_rhs(y, n_pad):
    """preds (B, N, D) -> (B, 8, n_pad) with rows [y, 1, 0.5||y||^2, 0...]^T.

    Padded columns are all-zero except a _BIG norm entry (never win a min).
    Pre-transposed so the MXU RHS is [K, N] and lane-dense along N_y.
    """
    bs, n, d = y.shape
    yn = 0.5 * jnp.sum(y * y, axis=-1, keepdims=True)
    ones = jnp.ones((bs, n, 1), y.dtype)
    zeros = jnp.zeros((bs, n, _K_AUG - (d + 2)), y.dtype)
    a = jnp.concatenate([y, ones, yn, zeros], axis=-1)
    if n_pad > n:
        pad_row = jnp.zeros((_K_AUG,), y.dtype).at[d + 1].set(_BIG)
        a = jnp.concatenate(
            [a, jnp.broadcast_to(pad_row, (bs, n_pad - n, _K_AUG))], axis=1)
    return jnp.transpose(a, (0, 2, 1))


def _chamfer_kernel(xa_ref, ya_ref, out_ref,
                    rowmin_ref, colmin_ref, l1acc_ref, l2acc_ref,
                    *, n_x, n_y):
    """One (batch-block, gts-tile, preds-tile) step of the Chamfer forward.

    xa_ref:     (BB, TM, 8)    augmented gts tile   (MXU LHS  [M, K])
    ya_ref:     (BB, 8, TN)    augmented preds tile (MXU RHS  [K, N])
    out_ref:    (BB, 1, 128)   lane 0 = loss_1, lane 1 = loss_2
    rowmin_ref: (BB, TM, 128)  lane-wide running min over preds (carried over j)
    colmin_ref: (nJ, BB, TN)   running min over gts points (carried over i)
    l1acc_ref:  (BB, 128)      partial sum for loss_1
    l2acc_ref:  (BB, 128)      partial sum for loss_2
    """
    i = pl.program_id(1)
    j = pl.program_id(2)
    n_i = pl.num_programs(1)
    n_j = pl.num_programs(2)

    _, tm, _ = xa_ref.shape
    tn = ya_ref.shape[2]
    n_strips = tn // 128

    # ---- init accumulators (per batch block / per i-tile) -------------------
    @pl.when(jnp.logical_and(i == 0, j == 0))
    def _():
        colmin_ref[...] = jnp.full(colmin_ref.shape, _BIG, dtype=colmin_ref.dtype)
        l1acc_ref[...] = jnp.zeros(l1acc_ref.shape, dtype=l1acc_ref.dtype)
        l2acc_ref[...] = jnp.zeros(l2acc_ref.shape, dtype=l2acc_ref.dtype)

    @pl.when(j == 0)
    def _():
        rowmin_ref[...] = jnp.full(rowmin_ref.shape, _BIG, dtype=rowmin_ref.dtype)

    # ---- half pairwise squared distances, entirely on the MXU ---------------
    # half_P[i,j] = 0.5||x_i||^2 + 0.5||y_j||^2 - x_i.y_j (padded points >= _BIG)
    half_p = jnp.einsum('bmk,bkn->bmn', xa_ref[...], ya_ref[...],
                        preferred_element_type=jnp.float32)      # (BB, TM, TN)

    # ---- running mins --------------------------------------------------------
    # Deferred lane-min: only 128-wide lane strip mins here (pure VPU); the
    # 128 -> 1 cross-lane XLU reduce happens once per i-tile at j == n_j-1.
    strips = half_p[:, :, 0:128]
    for s in range(1, n_strips):
        strips = jnp.minimum(strips, half_p[:, :, s * 128:(s + 1) * 128])
    rowmin_ref[...] = jnp.minimum(rowmin_ref[...], strips)

    # min over gts rows for each preds column (-> loss_1), carried across i.
    colmin_ref[j] = jnp.minimum(colmin_ref[j], jnp.min(half_p, axis=1))

    # ---- loss_2 contribution of this i-tile (after the last j) --------------
    @pl.when(j == n_j - 1)
    def _():
        rm = jnp.min(rowmin_ref[...], axis=2, keepdims=True)      # (BB, TM, 1)
        row_ids = i * tm + jax.lax.broadcasted_iota(jnp.int32, (1, tm, 1), 1)
        rm = jnp.where(row_ids < n_x, rm, 0.0)                    # drop padded rows
        l2acc_ref[...] += jnp.sum(rm, axis=1)                     # (BB,1)->(BB,128)

    # ---- loss_1 contribution of this j-tile (on the last i sweep) -----------
    @pl.when(i == n_i - 1)
    def _():
        col_ids = j * tn + jax.lax.broadcasted_iota(jnp.int32, (1, tn), 1)
        cm = jnp.where(col_ids < n_y, colmin_ref[j], 0.0)         # drop padded cols
        l1acc_ref[...] += jnp.sum(cm, axis=1, keepdims=True)      # (BB,1)->(BB,128)

    # ---- finalize both losses at the last tile of this batch block ----------
    @pl.when(jnp.logical_and(i == n_i - 1, j == n_j - 1))
    def _():
        lane = jax.lax.broadcasted_iota(jnp.int32, out_ref.shape, 2)
        # half_P carries a 0.5 factor -> re-apply the 2x on the final scalars.
        loss1 = (2.0 / n_y) * l1acc_ref[...][:, None, :]          # (BB, 1, 128)
        loss2 = (2.0 / n_x) * l2acc_ref[...][:, None, :]
        out_ref[...] = jnp.where(
            lane == 0, loss1,
            jnp.where(lane == 1, loss2, 0.0)).astype(out_ref.dtype)


def chamfer_loss(preds, gts, *, tile_m=None, tile_n=None, batch_block=None):
    """Equivalent of ChamferLoss().forward(preds, gts) -> (loss_1, loss_2)."""
    gts = gts.astype(jnp.float32)
    preds = preds.astype(jnp.float32)
    bs, n_x, d = gts.shape        # x = gts
    bs_y, n_y, d_y = preds.shape  # y = preds
    assert bs == bs_y and d == d_y and d + 2 <= _K_AUG

    dflt_tm, dflt_tn, fold_bytes = _default_tiling()
    if tile_m is None:
        tile_m = dflt_tm
    if tile_n is None:
        tile_n = dflt_tn

    # --- tile sizes / padding so tiles are (8, 128)-friendly and lane-dense --
    tile_n = max(128, _round_up(min(tile_n, _round_up(n_y, 128)), 128))
    n_y_pad = _round_up(n_y, tile_n)
    tile_m = max(8, _round_up(min(tile_m, _round_up(n_x, 8)), 8))
    n_x_pad = _round_up(n_x, tile_m)
    n_i = n_x_pad // tile_m
    n_j = n_y_pad // tile_n

    # Batch blocking: amortize per-step overhead, but keep >= 2 steps on the
    # parallel batch axis whenever bs >= 2 so both v7x TensorCores get work.
    if batch_block is None:
        cap = max(1, bs // 2)
        bb = 1
        for cand in range(2, cap + 1):
            if bs % cand == 0 and cand * tile_m * tile_n * 4 <= fold_bytes:
                bb = cand
        batch_block = bb
    assert bs % batch_block == 0
    bb = batch_block

    # --- augmented MXU operands (folds xx + yy - zz and padding masks in) -----
    lhs = _augment_lhs(gts, n_x_pad)      # (B, N_x_pad, 8)
    rhs = _augment_rhs(preds, n_y_pad)    # (B, 8, N_y_pad)

    kernel = functools.partial(_chamfer_kernel, n_x=n_x, n_y=n_y)

    # --- VMEM budget derived from actual usage (+ margin), not a flat cap -----
    f32b = 4
    lhs_tile = bb * tile_m * _K_AUG * f32b
    rhs_tile = bb * _K_AUG * tile_n * f32b
    out_tile = bb * 1 * 128 * f32b
    rowmin_b = bb * tile_m * 128 * f32b
    colmin_b = n_j * max(bb, 8) * tile_n * f32b         # sublane-padded
    acc_b = 2 * max(bb, 8) * 128 * f32b
    halfp_b = bb * tile_m * tile_n * f32b
    vmem_est = (2 * (lhs_tile + rhs_tile + out_tile)    # double-buffered I/O
                + rowmin_b + colmin_b + acc_b + 2 * halfp_b)
    vmem_limit = int(min(max(vmem_est + (8 << 20), 16 << 20), 64 << 20))

    flops = int(2 * bs * n_x_pad * n_y_pad * _K_AUG + 3 * bs * n_x_pad * n_y_pad)
    bytes_accessed = int(f32b * bs * (n_x_pad * _K_AUG + _K_AUG * n_y_pad + 128))

    out = pl.pallas_call(
        kernel,
        out_shape=jax.ShapeDtypeStruct((bs, 1, 128), jnp.float32),
        grid_spec=pltpu.PrefetchScalarGridSpec(
            num_scalar_prefetch=0,
            grid=(bs // bb, n_i, n_j),
            in_specs=[
                pl.BlockSpec((bb, tile_m, _K_AUG), lambda b, i, j: (b, i, 0)),
                pl.BlockSpec((bb, _K_AUG, tile_n), lambda b, i, j: (b, 0, j)),
            ],
            out_specs=pl.BlockSpec((bb, 1, 128), lambda b, i, j: (b, 0, 0)),
            scratch_shapes=[
                pltpu.VMEM((bb, tile_m, 128), jnp.float32),  # deferred row mins
                pltpu.VMEM((n_j, bb, tile_n), jnp.float32),  # col mins over i
                pltpu.VMEM((bb, 128), jnp.float32),          # loss_1 partial sum
                pltpu.VMEM((bb, 128), jnp.float32),          # loss_2 partial sum
            ],
        ),
        compiler_params=pltpu.CompilerParams(
            dimension_semantics=("parallel", "arbitrary", "arbitrary"),
            vmem_limit_bytes=vmem_limit,
        ),
        cost_estimate=pl.CostEstimate(
            flops=flops, transcendentals=0, bytes_accessed=bytes_accessed),
    )(lhs, rhs)

    return out[:, 0, 0], out[:, 0, 1]


def chamfer_loss_ref(preds, gts):
    """Plain-JAX reference mirroring the PyTorch code (f32-accurate)."""
    x, y = gts, preds
    xx = jnp.sum(x * x, axis=-1)                       # (B, N_x)
    yy = jnp.sum(y * y, axis=-1)                       # (B, N_y)
    zz = jnp.einsum('bid,bjd->bij', x, y,
                    precision=jax.lax.Precision.HIGHEST)
    P = xx[:, :, None] + yy[:, None, :] - 2.0 * zz
    loss_1 = jnp.mean(jnp.min(P, axis=1), axis=1)
    loss_2 = jnp.mean(jnp.min(P, axis=2), axis=1)
    return loss_1, loss_2


if __name__ == "__main__":
    key = jax.random.PRNGKey(0)
    k1, k2, k3, k4 = jax.random.split(key, 4)

    # Small case matching the module's (bs, num_points, points_dim) convention.
    bs, n_gts, n_preds, d = 2, 128, 96, 3
    gts = jax.random.normal(k1, (bs, n_gts, d), dtype=jnp.float32)
    preds = jax.random.normal(k2, (bs, n_preds, d), dtype=jnp.float32)

    loss_1, loss_2 = chamfer_loss(preds, gts)
    jax.block_until_ready((loss_1, loss_2))
    ref_1, ref_2 = chamfer_loss_ref(preds, gts)
    assert jnp.allclose(loss_1, ref_1, rtol=1e-3, atol=1e-3), (loss_1, ref_1)
    assert jnp.allclose(loss_2, ref_2, rtol=1e-3, atol=1e-3), (loss_2, ref_2)

    # Ragged case exercising the (i, j) tiling + padding/masking path.
    gts2 = jax.random.normal(k3, (1, 1000, 3), dtype=jnp.float32)
    preds2 = jax.random.normal(k4, (1, 700, 3), dtype=jnp.float32)
    l1b, l2b = chamfer_loss(preds2, gts2, tile_m=256, tile_n=256)
    jax.block_until_ready((l1b, l2b))
    r1b, r2b = chamfer_loss_ref(preds2, gts2)
    assert jnp.allclose(l1b, r1b, rtol=1e-3, atol=1e-3), (l1b, r1b)
    assert jnp.allclose(l2b, r2b, rtol=1e-3, atol=1e-3), (l2b, r2b)

    print("KERNEL_OK")
</pallas_src>

<mosaic_0001>
module attributes {stable_mosaic.version = 11 : i64} {
  func.func @_chamfer_kernel(%arg0: i32, %arg1: i32, %arg2: i32, %arg3: memref<1x128x8xf32, #tpu.memory_space<vmem>>, %arg4: memref<1x8x128xf32, #tpu.memory_space<vmem>>, %arg5: memref<1x1x128xf32, #tpu.memory_space<vmem>>, %arg6: memref<1x128x128xf32, #tpu.memory_space<vmem>>, %arg7: memref<1x1x128xf32, #tpu.memory_space<vmem>>, %arg8: memref<1x128xf32, #tpu.memory_space<vmem>>, %arg9: memref<1x128xf32, #tpu.memory_space<vmem>>) attributes {dimension_semantics = [#tpu.dimension_semantics<parallel>, #tpu.dimension_semantics<arbitrary>, #tpu.dimension_semantics<arbitrary>], iteration_bounds = array<i64: 2, 1, 1>, scalar_prefetch = 0 : i64, scratch_operands = 4 : i64, tpu.core_type = #tpu.core_type<tc>, window_params = [{transform_indices = @transform_0, window_bounds = array<i64: 1, 128, 8>}, {transform_indices = @transform_1, window_bounds = array<i64: 1, 8, 128>}, {transform_indices = @transform_2, window_bounds = array<i64: 1, 1, 128>}]} {
    %c0_i32 = arith.constant 0 : i32
    %0 = arith.cmpi eq, %arg1, %c0_i32 : i32
    %c0_i32_0 = arith.constant 0 : i32
    %1 = arith.cmpi eq, %arg2, %c0_i32_0 : i32
    %2 = arith.andi %0, %1 : i1
    %3 = arith.extui %2 : i1 to i32
    %c0_i32_1 = arith.constant 0 : i32
    %4 = arith.cmpi ne, %3, %c0_i32_1 : i32
    scf.if %4 {
      %cst_27 = arith.constant 1.000000e+30 : f32
      %34 = vector.broadcast %cst_27 : f32 to vector<1x1x128xf32>
      %c0_28 = arith.constant 0 : index
      %c0_29 = arith.constant 0 : index
      %c0_30 = arith.constant 0 : index
      %35 = vector.load %arg7[%c0_28, %c0_29, %c0_30] : memref<1x1x128xf32, #tpu.memory_space<vmem>>, vector<1x1x128xf32>
      tpu.vector_store %arg7[%c0_28, %c0_29, %c0_30], %34 {strides = array<i32>} : memref<1x1x128xf32, #tpu.memory_space<vmem>>, vector<1x1x128xf32>,
      %cst_31 = arith.constant 0.000000e+00 : f32
      %36 = vector.broadcast %cst_31 : f32 to vector<1x128xf32>
      %c0_32 = arith.constant 0 : index
      %c0_33 = arith.constant 0 : index
      %37 = vector.load %arg8[%c0_32, %c0_33] : memref<1x128xf32, #tpu.memory_space<vmem>>, vector<1x128xf32>
      tpu.vector_store %arg8[%c0_32, %c0_33], %36 {strides = array<i32>} : memref<1x128xf32, #tpu.memory_space<vmem>>, vector<1x128xf32>,
      %cst_34 = arith.constant 0.000000e+00 : f32
      %38 = vector.broadcast %cst_34 : f32 to vector<1x128xf32>
      %c0_35 = arith.constant 0 : index
      %c0_36 = arith.constant 0 : index
      %39 = vector.load %arg9[%c0_35, %c0_36] : memref<1x128xf32, #tpu.memory_space<vmem>>, vector<1x128xf32>
      tpu.vector_store %arg9[%c0_35, %c0_36], %38 {strides = array<i32>} : memref<1x128xf32, #tpu.memory_space<vmem>>, vector<1x128xf32>,
    } else {
    }
    %c0_i32_2 = arith.constant 0 : i32
    %5 = arith.cmpi eq, %arg2, %c0_i32_2 : i32
    %6 = arith.extui %5 : i1 to i32
    %c0_i32_3 = arith.constant 0 : i32
    %7 = arith.cmpi ne, %6, %c0_i32_3 : i32
    scf.if %7 {
      %cst_27 = arith.constant 1.000000e+30 : f32
      %34 = vector.broadcast %cst_27 : f32 to vector<1x128x128xf32>
      %c0_28 = arith.constant 0 : index
      %c0_29 = arith.constant 0 : index
      %c0_30 = arith.constant 0 : index
      %35 = vector.load %arg6[%c0_28, %c0_29, %c0_30] : memref<1x128x128xf32, #tpu.memory_space<vmem>>, vector<1x128x128xf32>
      tpu.vector_store %arg6[%c0_28, %c0_29, %c0_30], %34 {strides = array<i32>} : memref<1x128x128xf32, #tpu.memory_space<vmem>>, vector<1x128x128xf32>,
    } else {
    }
    %c0 = arith.constant 0 : index
    %c0_4 = arith.constant 0 : index
    %c0_5 = arith.constant 0 : index
    %8 = vector.load %arg3[%c0, %c0_4, %c0_5] : memref<1x128x8xf32, #tpu.memory_space<vmem>>, vector<1x128x8xf32>
    %c0_6 = arith.constant 0 : index
    %c0_7 = arith.constant 0 : index
    %c0_8 = arith.constant 0 : index
    %9 = vector.load %arg4[%c0_6, %c0_7, %c0_8] : memref<1x8x128xf32, #tpu.memory_space<vmem>>, vector<1x8x128xf32>
    "tpu.trace_start"() <{level = 10 : i32, message = "bmk,bkn->bmn"}> : () -> ()
    %cst = arith.constant dense<0.000000e+00> : vector<1x128x128xf32>
    %10 = tpu.matmul %8, %9, %cst {dimension_numbers = #tpu.dot_dimension_numbers<[2], [1], [1], [2], [0, 0, 0, 1, 1, 2], [0], [0]>} : vector<1x128x8xf32>, vector<1x8x128xf32>, vector<1x128x128xf32> -> vector<1x128x128xf32>
    "tpu.trace_stop"() : () -> ()
    %c0_9 = arith.constant 0 : index
    %c0_10 = arith.constant 0 : index
    %c0_11 = arith.constant 0 : index
    %11 = vector.load %arg6[%c0_9, %c0_10, %c0_11] : memref<1x128x128xf32, #tpu.memory_space<vmem>>, vector<1x128x128xf32>
    %12 = arith.minimumf %11, %10 : vector<1x128x128xf32>
    %c0_12 = arith.constant 0 : index
    %c0_13 = arith.constant 0 : index
    %c0_14 = arith.constant 0 : index
    %13 = vector.load %arg6[%c0_12, %c0_13, %c0_14] : memref<1x128x128xf32, #tpu.memory_space<vmem>>, vector<1x128x128xf32>
    tpu.vector_store %arg6[%c0_12, %c0_13, %c0_14], %12 {strides = array<i32>} : memref<1x128x128xf32, #tpu.memory_space<vmem>>, vector<1x128x128xf32>,
    %14 = arith.index_cast %arg2 : i32 to index
    %c0_15 = arith.constant 0 : index
    %c0_16 = arith.constant 0 : index
    %15 = vector.load %arg7[%14, %c0_15, %c0_16] : memref<1x1x128xf32, #tpu.memory_space<vmem>>, vector<1x1x128xf32>
    %16 = vector.shape_cast %15 : vector<1x1x128xf32> to vector<1x128xf32>
    %cst_17 = arith.constant dense<0x7F800000> : vector<1x128xf32>
    %17 = vector.multi_reduction <minimumf>, %10, %cst_17 [1] : vector<1x128x128xf32> to vector<1x128xf32>
    %18 = arith.minimumf %16, %17 : vector<1x128xf32>
    %19 = arith.index_cast %arg2 : i32 to index
    %c0_18 = arith.constant 0 : index
    %c0_19 = arith.constant 0 : index
    %20 = vector.load %arg7[%19, %c0_18, %c0_19] : memref<1x1x128xf32, #tpu.memory_space<vmem>>, vector<1x1x128xf32>
    %21 = vector.shape_cast %20 : vector<1x1x128xf32> to vector<1x128xf32>
    %22 = vector.shape_cast %18 : vector<1x128xf32> to vector<1x1x128xf32>
    tpu.vector_store %arg7[%19, %c0_18, %c0_19], %22 {strides = array<i32>} : memref<1x1x128xf32, #tpu.memory_space<vmem>>, vector<1x1x128xf32>,
    %c0_i32_20 = arith.constant 0 : i32
    %23 = arith.cmpi eq, %arg2, %c0_i32_20 : i32
    %24 = arith.extui %23 : i1 to i32
    %c0_i32_21 = arith.constant 0 : i32
    %25 = arith.cmpi ne, %24, %c0_i32_21 : i32
    scf.if %25 {
      %c0_27 = arith.constant 0 : index
      %c0_28 = arith.constant 0 : index
      %c0_29 = arith.constant 0 : index
      %34 = vector.load %arg6[%c0_27, %c0_28, %c0_29] : memref<1x128x128xf32, #tpu.memory_space<vmem>>, vector<1x128x128xf32>
      %cst_30 = arith.constant dense<0x7F800000> : vector<1x128xf32>
      %35 = vector.multi_reduction <minimumf>, %34, %cst_30 [2] : vector<1x128x128xf32> to vector<1x128xf32>
      %36 = vector.shape_cast %35 : vector<1x128xf32> to vector<1x128x1xf32>
      %c128_i32 = arith.constant 128 : i32
      %37 = arith.muli %arg1, %c128_i32 : i32
      %38 = tpu.iota {dimensions = array<i32: 1>} : vector<1x128x1xi32>
      %39 = vector.broadcast %37 : i32 to vector<1x128x1xi32>
      %40 = arith.addi %39, %38 : vector<1x128x1xi32>
      %c128_i32_31 = arith.constant 128 : i32
      %41 = vector.broadcast %c128_i32_31 : i32 to vector<1x128x1xi32>
      %42 = arith.cmpi slt, %40, %41 : vector<1x128x1xi32>
      %cst_32 = arith.constant 0.000000e+00 : f32
      %43 = vector.broadcast %cst_32 : f32 to vector<1x128x1xf32>
      %44 = arith.select %42, %36, %43 : vector<1x128x1xi1>, vector<1x128x1xf32>
      %c0_33 = arith.constant 0 : index
      %c0_34 = arith.constant 0 : index
      %45 = vector.load %arg9[%c0_33, %c0_34] : memref<1x128xf32, #tpu.memory_space<vmem>>, vector<1x128xf32>
      %cst_35 = arith.constant dense<0.000000e+00> : vector<1x1xf32>
      %46 = vector.multi_reduction <add>, %44, %cst_35 [1] : vector<1x128x1xf32> to vector<1x1xf32>
      %47 = vector.broadcast %46 : vector<1x1xf32> to vector<1x128xf32>
      %48 = arith.addf %45, %47 : vector<1x128xf32>
      %c0_36 = arith.constant 0 : index
      %c0_37 = arith.constant 0 : index
      %49 = vector.load %arg9[%c0_36, %c0_37] : memref<1x128xf32, #tpu.memory_space<vmem>>, vector<1x128xf32>
      tpu.vector_store %arg9[%c0_36, %c0_37], %48 {strides = array<i32>} : memref<1x128xf32, #tpu.memory_space<vmem>>, vector<1x128xf32>,
    } else {
    }
    %c0_i32_22 = arith.constant 0 : i32
    %26 = arith.cmpi eq, %arg1, %c0_i32_22 : i32
    %27 = arith.extui %26 : i1 to i32
    %c0_i32_23 = arith.constant 0 : i32
    %28 = arith.cmpi ne, %27, %c0_i32_23 : i32
    scf.if %28 {
      %c128_i32 = arith.constant 128 : i32
      %34 = arith.muli %arg2, %c128_i32 : i32
      %35 = tpu.iota {dimensions = array<i32: 1>} : vector<1x128xi32>
      %36 = vector.broadcast %34 : i32 to vector<1x128xi32>
      %37 = arith.addi %36, %35 : vector<1x128xi32>
      %c96_i32 = arith.constant 96 : i32
      %38 = vector.broadcast %c96_i32 : i32 to vector<1x128xi32>
      %39 = arith.cmpi slt, %37, %38 : vector<1x128xi32>
      %40 = arith.index_cast %arg2 : i32 to index
      %c0_27 = arith.constant 0 : index
      %c0_28 = arith.constant 0 : index
      %41 = vector.load %arg7[%40, %c0_27, %c0_28] : memref<1x1x128xf32, #tpu.memory_space<vmem>>, vector<1x1x128xf32>
      %42 = vector.shape_cast %41 : vector<1x1x128xf32> to vector<1x128xf32>
      %cst_29 = arith.constant 0.000000e+00 : f32
      %43 = vector.broadcast %cst_29 : f32 to vector<1x128xf32>
      %44 = arith.select %39, %42, %43 : vector<1x128xi1>, vector<1x128xf32>
      %c0_30 = arith.constant 0 : index
      %c0_31 = arith.constant 0 : index
      %45 = vector.load %arg8[%c0_30, %c0_31] : memref<1x128xf32, #tpu.memory_space<vmem>>, vector<1x128xf32>
      %cst_32 = arith.constant dense<0.000000e+00> : vector<1xf32>
      %46 = vector.multi_reduction <add>, %44, %cst_32 [1] : vector<1x128xf32> to vector<1xf32>
      %47 = vector.shape_cast %46 : vector<1xf32> to vector<1x1xf32>
      %48 = vector.broadcast %47 : vector<1x1xf32> to vector<1x128xf32>
      %49 = arith.addf %45, %48 : vector<1x128xf32>
      %c0_33 = arith.constant 0 : index
      %c0_34 = arith.constant 0 : index
      %50 = vector.load %arg8[%c0_33, %c0_34] : memref<1x128xf32, #tpu.memory_space<vmem>>, vector<1x128xf32>
      tpu.vector_store %arg8[%c0_33, %c0_34], %49 {strides = array<i32>} : memref<1x128xf32, #tpu.memory_space<vmem>>, vector<1x128xf32>,
    } else {
    }
    %c0_i32_24 = arith.constant 0 : i32
    %29 = arith.cmpi eq, %arg1, %c0_i32_24 : i32
    %c0_i32_25 = arith.constant 0 : i32
    %30 = arith.cmpi eq, %arg2, %c0_i32_25 : i32
    %31 = arith.andi %29, %30 : i1
    %32 = arith.extui %31 : i1 to i32
    %c0_i32_26 = arith.constant 0 : i32
    %33 = arith.cmpi ne, %32, %c0_i32_26 : i32
    scf.if %33 {
      %34 = tpu.iota {dimensions = array<i32: 2>} : vector<1x1x128xi32>
      %c0_27 = arith.constant 0 : index
      %c0_28 = arith.constant 0 : index
      %35 = vector.load %arg8[%c0_27, %c0_28] : memref<1x128xf32, #tpu.memory_space<vmem>>, vector<1x128xf32>
      %36 = vector.shape_cast %35 : vector<1x128xf32> to vector<1x1x128xf32>
      %cst_29 = arith.constant 0.020833334 : f32
      %37 = vector.broadcast %cst_29 : f32 to vector<1x1x128xf32>
      %38 = arith.mulf %37, %36 : vector<1x1x128xf32>
      %c0_30 = arith.constant 0 : index
      %c0_31 = arith.constant 0 : index
      %39 = vector.load %arg9[%c0_30, %c0_31] : memref<1x128xf32, #tpu.memory_space<vmem>>, vector<1x128xf32>
      %40 = vector.shape_cast %39 : vector<1x128xf32> to vector<1x1x128xf32>
      %cst_32 = arith.constant 1.562500e-02 : f32
      %41 = vector.broadcast %cst_32 : f32 to vector<1x1x128xf32>
      %42 = arith.mulf %41, %40 : vector<1x1x128xf32>
      %c0_i32_33 = arith.constant 0 : i32
      %43 = vector.broadcast %c0_i32_33 : i32 to vector<1x1x128xi32>
      %44 = arith.cmpi eq, %34, %43 : vector<1x1x128xi32>
      %c1_i32 = arith.constant 1 : i32
      %45 = vector.broadcast %c1_i32 : i32 to vector<1x1x128xi32>
      %46 = arith.cmpi eq, %34, %45 : vector<1x1x128xi32>
      %cst_34 = arith.constant 0.000000e+00 : f32
      %47 = vector.broadcast %cst_34 : f32 to vector<1x1x128xf32>
      %48 = arith.select %46, %42, %47 : vector<1x1x128xi1>, vector<1x1x128xf32>
      %49 = arith.select %44, %38, %48 : vector<1x1x128xi1>, vector<1x1x128xf32>
      %c0_35 = arith.constant 0 : index
      %c0_36 = arith.constant 0 : index
      %c0_37 = arith.constant 0 : index
      %50 = vector.load %arg5[%c0_35, %c0_36, %c0_37] : memref<1x1x128xf32, #tpu.memory_space<vmem>>, vector<1x1x128xf32>
      tpu.vector_store %arg5[%c0_35, %c0_36, %c0_37], %49 {strides = array<i32>} : memref<1x1x128xf32, #tpu.memory_space<vmem>>, vector<1x1x128xf32>,
    } else {
    }
    return
  }
  func.func @transform_0(%arg0: i32, %arg1: i32, %arg2: i32) -> (i32, i32, i32) {
    %c0_i32 = arith.constant 0 : i32
    %c0_i32_0 = arith.constant 0 : i32
    return %arg0, %arg1, %c0_i32 : i32, i32, i32
  }
  func.func @transform_1(%arg0: i32, %arg1: i32, %arg2: i32) -> (i32, i32, i32) {
    %c0_i32 = arith.constant 0 : i32
    %c0_i32_0 = arith.constant 0 : i32
    return %arg0, %c0_i32, %arg2 : i32, i32, i32
  }
  func.func @transform_2(%arg0: i32, %arg1: i32, %arg2: i32) -> (i32, i32, i32) {
    %c0_i32 = arith.constant 0 : i32
    %c0_i32_0 = arith.constant 0 : i32
    %c0_i32_1 = arith.constant 0 : i32
    return %arg0, %c0_i32, %c0_i32_0 : i32, i32, i32
  }
}

</mosaic_0001>

<llo_original>
// kernel: tpu_custom_call.1
$region0: #{tpu_custom_call.1}
  #allocation0 [shape = 'u32[]', space=smem, size = 0x4, offset = 0x4, fixed_abs, tag = 'smem constant byte address 0x4 - core index']
  #allocation1 [shape = 'u32[72,128]{1,0:T(1,128)}', space=vmem, size = 0x9000, scoped, tag = 'internal scratch']
  #allocation2 [shape = 'f32[1,128,128]{2,1,0:T(8,128)}', space=vmem, size = 0x10000, scoped, tag = 'scratch operand']
  #allocation3 [shape = 'f32[1,1,128]{2,1,0:T(1,128)}', space=vmem, size = 0x200, scoped, tag = 'scratch operand']
  #allocation4 [shape = 'f32[1,128]{1,0:T(1,128)}', space=vmem, size = 0x200, scoped, tag = 'scratch operand']
  #allocation5 [shape = 'f32[1,128]{1,0:T(1,128)}', space=vmem, size = 0x200, scoped, tag = 'scratch operand']
  %s0 = inlined_call_operand.vmem [shape: f32[2,128,8], index: 0, kind: input, shape index: {}]
  %s1 = inlined_call_operand.vmem [shape: f32[2,8,128], index: 1, kind: input, shape index: {}]
  %s2 = inlined_call_operand.hbm [shape: f32[2,1,128], index: 2, kind: output, shape index: {}]
  %s3 = sld [smem:[#allocation0]]
  $region61: #{tpu_custom_call.1} parent=0
    _
  %s5 = ssub.s32 1, %s3
  %s6 = scalar_select 0, %s5, %s3
  $region1: #{tpu_custom_call.1} parent=0
    #allocation6 [shape = 'u8[1024]{0}', space=vmem, size = 0x400, scoped, tag = 'output window, operand 0']
    #allocation7 [shape = 's32[2]{0}', space=sflag, size = 0x8, scoped, tag = 'scoped memory for tpu_custom_call.1']
    %7 = vsyncpa [#allocation7], 0
    %s8 = scalar_lea.sflag [#allocation7], 1
    %9 = vsyncpa %s8, 0
    loop: start=0, step=1, limit=4
    $region2: #{tpu_custom_call.1} parent=1 // loop_pre_header
      _
    $region3: #{tpu_custom_call.1} parent=1 // loop_header
      %s11 = sphi 0, %s15
      %p12 = scmp.ge.s32.totalorder %s11, 4
      %s18 = sphi 0, %s37
      %s19 = sphi 0, %s33
      %s20 = sphi 0, %s29
      %s21 = sphi 0, %s18
      %s22 = sphi 0, %s19
      %s23 = sphi 0, %s20
      %s24 = sphi 0, %s21
      %s25 = sphi 0, %s22
      %s26 = sphi 0, %s23
      %s42 = sphi 0, %s44
      %s45 = sphi 0, %s42
      %s46 = sphi 0, %s45
      %s62 = sphi 0, %s46
      %s70 = sphi 0, %s72
      %s73 = sphi 0, %s70
      %s74 = sphi 0, %s73
      %s90 = sphi 0, %s74
      %s96 = sphi 0, %s98
      %s99 = sphi 0, %s96
      %s100 = sphi 0, %s99
      %s116 = sphi 0, %s100
    $region4: #{tpu_custom_call.1} parent=1 // loop_header_branch
      %14 = sbr.rel (%p12) target = $region8
    $region5: #{tpu_custom_call.1} parent=1 // loop_body
      %s16 = ssub.s32 %s11, 1
      %s17 = ssub.s32 %s11, 2
      %s27 = sadd.s32 1, %s20
      %p28 = scmp.ge.s32.totalorder %s27, 1
      %s29 = scalar_select %p28, 0, %s27
      %s30 = sadd.s32 1, %s19
      %s31 = scalar_select %p28, %s30, %s19
      %p32 = scmp.ge.s32.totalorder %s31, 1
      %s33 = scalar_select %p32, 0, %s31
      %s34 = sadd.s32 1, %s18
      %s35 = scalar_select %p32, %s34, %s18
      %p36 = scmp.ge.s32.totalorder %s35, 2
      %s37 = scalar_select %p36, 0, %s35
      %s38 = ssub.s32 %s18, %s37
      %s39 = ssub.s32 %s19, %s33
      %s40 = sor.u32 %s38, %s39
      %p41 = scmp.eq.s32.totalorder %s40, 0
      %s43 = sadd.s32 %s42, 1
      %s44 = scalar_select %p41, %s42, %s43
      %p47 = pneg %p41
      %p48 = scmp.eq.s32.totalorder %s11, 1
      %p49 = por %p47, %p48
      %p50 = scmp.ne.s32.totalorder %s42, %s45
      %p51 = scmp.eq.s32.totalorder %s11, 0
      %p52 = por %p50, %p51
      %p53 = scmp.ne.s32.totalorder %s42, %s45
      %p54 = scmp.eq.s32.totalorder %s16, 1
      %p55 = por %p53, %p54
      %p56 = scmp.ne.s32.totalorder %s45, %s46
      %p57 = scmp.eq.s32.totalorder %s16, 0
      %p58 = por %p56, %p57
      %p59 = scmp.ne.s32.totalorder %s45, %s46
      %p60 = scmp.eq.s32.totalorder %s17, 1
      %p61 = por %p59, %p60
      %p63 = scmp.ne.s32.totalorder %s46, %s62
      %p64 = scmp.eq.s32.totalorder %s17, 0
      %p65 = por %p63, %p64
      %s66 = ssub.s32 %s18, %s37
      %s67 = ssub.s32 %s20, %s29
      %s68 = sor.u32 %s66, %s67
      %p69 = scmp.eq.s32.totalorder %s68, 0
      %s71 = sadd.s32 %s70, 1
      %s72 = scalar_select %p69, %s70, %s71
      %p75 = pneg %p69
      %p76 = scmp.eq.s32.totalorder %s11, 1
      %p77 = por %p75, %p76
      %p78 = scmp.ne.s32.totalorder %s70, %s73
      %p79 = scmp.eq.s32.totalorder %s11, 0
      %p80 = por %p78, %p79
      %p81 = scmp.ne.s32.totalorder %s70, %s73
      %p82 = scmp.eq.s32.totalorder %s16, 1
      %p83 = por %p81, %p82
      %p84 = scmp.ne.s32.totalorder %s73, %s74
      %p85 = scmp.eq.s32.totalorder %s16, 0
      %p86 = por %p84, %p85
      %p87 = scmp.ne.s32.totalorder %s73, %s74
      %p88 = scmp.eq.s32.totalorder %s17, 1
      %p89 = por %p87, %p88
      %p91 = scmp.ne.s32.totalorder %s74, %s90
      %p92 = scmp.eq.s32.totalorder %s17, 0
      %p93 = por %p91, %p92
      %s94 = ssub.s32 %s18, %s37
      %p95 = scmp.eq.s32.totalorder %s94, 0
      %s97 = sadd.s32 %s96, 1
      %s98 = scalar_select %p95, %s96, %s97
      %p101 = pneg %p95
      %p102 = scmp.eq.s32.totalorder %s11, 1
      %p103 = por %p101, %p102
      %p104 = scmp.ne.s32.totalorder %s96, %s99
      %p105 = scmp.eq.s32.totalorder %s11, 0
      %p106 = por %p104, %p105
      %p107 = scmp.ne.s32.totalorder %s96, %s99
      %p108 = scmp.eq.s32.totalorder %s16, 1
      %p109 = por %p107, %p108
      %p110 = scmp.ne.s32.totalorder %s99, %s100
      %p111 = scmp.eq.s32.totalorder %s16, 0
      %p112 = por %p110, %p111
      %p113 = scmp.ne.s32.totalorder %s99, %s100
      %p114 = scmp.eq.s32.totalorder %s17, 1
      %p115 = por %p113, %p114
      %p117 = scmp.ne.s32.totalorder %s100, %s116
      %p118 = scmp.eq.s32.totalorder %s17, 0
      %p119 = por %p117, %p118
      %p120 = scmp.le.s32.totalorder 1, %s11
      %p121 = scmp.lt.s32.totalorder %s11, 3
      %p122 = pnand %p120, %p121
      %p123 = pneg %p122
      // Predicated region
      $region9: #{tpu_custom_call.1} parent=5 // pred_check
        _
      $region10: #{tpu_custom_call.1} parent=5 // pred_check_branch
        %125 = sbr.rel (%p122) target = $region12
      $region11: #{tpu_custom_call.1} parent=5 // pred_region
        %s126 = ssub.s32 %s11, 1
      $region12: #{tpu_custom_call.1} parent=5 // pred_fallthru
        _
      %p127 = scmp.lt.s32.totalorder %s11, 2
      // Predicated region
      $region13: #{tpu_custom_call.1} parent=5 // pred_check
        %p128 = pneg %p127
      $region14: #{tpu_custom_call.1} parent=5 // pred_check_branch
        %130 = sbr.rel (%p128) target = $region16
      $region15: #{tpu_custom_call.1} parent=5 // pred_region
        // Predicated region
        $region17: #{tpu_custom_call.1} parent=15 // pred_check
          %p131 = pneg %p52
        $region18: #{tpu_custom_call.1} parent=15 // pred_check_branch
          %133 = sbr.rel (%p131) target = $region20
        $region19: #{tpu_custom_call.1} parent=15 // pred_region
          %s134 = smul.u32 16, %s19
          %p135 = scmp.lt.s32.totalorder %s18, 1
          %s136 = scalar_select %p135, %s18, 1
          %p137 = scmp.lt.s32.totalorder %s134, 15
          %s138 = scalar_select %p137, %s134, 15
          %s139 = smul.addr %s136, 16
          %s140 = sadd.s32 %s138, %s139
          %s141 = smul.addr %s140, 8
          %s142 = scalar_lea.vmem %s0, %s141
          %s143 = smul.u32 16, %s19
        $region20: #{tpu_custom_call.1} parent=15 // pred_fallthru
          _
        // Predicated region
        $region21: #{tpu_custom_call.1} parent=15 // pred_check
          %p144 = pneg %p80
        $region22: #{tpu_custom_call.1} parent=15 // pred_check_branch
          %146 = sbr.rel (%p144) target = $region24
        $region23: #{tpu_custom_call.1} parent=15 // pred_region
          %p147 = scmp.lt.s32.totalorder %s18, 1
          %s148 = scalar_select %p147, %s18, 1
          %p149 = scmp.lt.s32.totalorder %s20, 0
          %s150 = scalar_select %p149, %s20, 0
          %s151 = sadd.s32 %s150, %s148
          %s152 = smul.addr %s151, 8
          %s153 = scalar_lea.vmem %s1, %s152
        $region24: #{tpu_custom_call.1} parent=15 // pred_fallthru
          _
      $region16: #{tpu_custom_call.1} parent=5 // pred_fallthru
        _
      %p154 = scmp.le.s32.totalorder 1, %s11
      %p155 = scmp.lt.s32.totalorder %s11, 3
      %p156 = pnand %p154, %p155
      %p157 = pneg %p156
      // Predicated region
      $region25: #{tpu_custom_call.1} parent=5 // pred_check
        _
      $region26: #{tpu_custom_call.1} parent=5 // pred_check_branch
        %159 = sbr.rel (%p156) target = $region28
      $region27: #{tpu_custom_call.1} parent=5 // pred_region
        %s160 = ssub.s32 %s11, 1
        %s161 = smul.u32 16, %s22
        %p162 = scmp.lt.s32.totalorder %s21, 1
        %s163 = scalar_select %p162, %s21, 1
        %p164 = scmp.lt.s32.totalorder %s161, 15
        %s165 = scalar_select %p164, %s161, 15
        %s166 = smul.addr %s163, 16
        %s167 = sadd.s32 %s165, %s166
        %s168 = smul.addr %s167, 8
        %s169 = scalar_lea.vmem %s0, %s168
        %p170 = pneg %p58
        %p171 = pneg %p55
        %p172 = scmp.lt.s32.totalorder %s21, 1
        %s173 = scalar_select %p172, %s21, 1
        %p174 = scmp.lt.s32.totalorder %s23, 0
        %s175 = scalar_select %p174, %s23, 0
        %s176 = sadd.s32 %s175, %s173
        %s177 = smul.addr %s176, 8
        %s178 = scalar_lea.vmem %s1, %s177
        %p179 = pneg %p86
        %p180 = pneg %p83
        %p181 = pneg %p112
        %p182 = pneg %p109
        %s183 = sand.u32 %s99, 1
        %s184 = scalar_lea.sflag [#allocation7], %s183
        %s185 = sand.u32 %s99, 1
        %s186 = scalar_lea.vmem [#allocation6], %s185
        %s187 = smul.u32 16, %s22
        %p188 = scmp.lt.s32.totalorder %s21, 1
        %s189 = scalar_select %p188, %s21, 1
        %p190 = scmp.lt.s32.totalorder %s187, 15
        %s191 = scalar_select %p190, %s187, 15
        %s192 = smul.addr %s189, 16
        %s193 = sadd.s32 %s191, %s192
        %s194 = smul.addr %s193, 8
        %s195 = scalar_lea.vmem %s0, %s194
        %s196 = smul.u32 16, %s22
        %p197 = scmp.lt.s32.totalorder %s21, 1
        %s198 = scalar_select %p197, %s21, 1
        %p199 = scmp.lt.s32.totalorder %s23, 0
        %s200 = scalar_select %p199, %s23, 0
        %s201 = sadd.s32 %s200, %s198
        %s202 = smul.addr %s201, 8
        %s203 = scalar_lea.vmem %s1, %s202
        %p204 = scmp.eq.s32.totalorder %s22, 0
        %p205 = scmp.eq.s32.totalorder %s23, 0
        %p206 = pnand %p204, %p205
        %p207 = pneg %p206
        // Predicated region
        $region29: #{tpu_custom_call.1} parent=27 // pred_check
          _
        $region30: #{tpu_custom_call.1} parent=27 // pred_check_branch
          %209 = sbr.rel (%p206) target = $region32
        $region31: #{tpu_custom_call.1} parent=27 // pred_region
          %210 = vst [vmem:[#allocation3] sm:$0x1] 1e+30
          %211 = vst [vmem:[#allocation4] sm:$0x1] 0.0
          %212 = vst [vmem:[#allocation5] sm:$0x1] 0.0
        $region32: #{tpu_custom_call.1} parent=27 // pred_fallthru
          _
        // Predicated region
        $region33: #{tpu_custom_call.1} parent=27 // pred_check
          %p213 = pneg %p205
        $region34: #{tpu_custom_call.1} parent=27 // pred_check_branch
          %215 = sbr.rel (%p213) target = $region36
        $region35: #{tpu_custom_call.1} parent=27 // pred_region
          %216 = vst [vmem:[#allocation2] sm:$0xff] 1e+30
          %217 = vst [vmem:[#allocation2 + $0x8] sm:$0xff] 1e+30
          %218 = vst [vmem:[#allocation2 + $0x10] sm:$0xff] 1e+30
          %219 = vst [vmem:[#allocation2 + $0x18] sm:$0xff] 1e+30
          %220 = vst [vmem:[#allocation2 + $0x20] sm:$0xff] 1e+30
          %221 = vst [vmem:[#allocation2 + $0x28] sm:$0xff] 1e+30
          %222 = vst [vmem:[#allocation2 + $0x30] sm:$0xff] 1e+30
          %223 = vst [vmem:[#allocation2 + $0x38] sm:$0xff] 1e+30
          %224 = vst [vmem:[#allocation2 + $0x40] sm:$0xff] 1e+30
          %225 = vst [vmem:[#allocation2 + $0x48] sm:$0xff] 1e+30
          %226 = vst [vmem:[#allocation2 + $0x50] sm:$0xff] 1e+30
          %227 = vst [vmem:[#allocation2 + $0x58] sm:$0xff] 1e+30
          %228 = vst [vmem:[#allocation2 + $0x60] sm:$0xff] 1e+30
          %229 = vst [vmem:[#allocation2 + $0x68] sm:$0xff] 1e+30
          %230 = vst [vmem:[#allocation2 + $0x70] sm:$0xff] 1e+30
          %231 = vst [vmem:[#allocation2 + $0x78] sm:$0xff] 1e+30
        $region36: #{tpu_custom_call.1} parent=27 // pred_fallthru
          _
        %v232 = vld [vmem:[%s195] sm:$0xff]
        %v233 = vld [vmem:[%s195 + $0x8] sm:$0xff]
        %v234 = vld [vmem:[%s195 + $0x10] sm:$0xff]
        %v235 = vld [vmem:[%s195 + $0x18] sm:$0xff]
        %v236 = vld [vmem:[%s195 + $0x20] sm:$0xff]
        %v237 = vld [vmem:[%s195 + $0x28] sm:$0xff]
        %v238 = vld [vmem:[%s195 + $0x30] sm:$0xff]
        %v239 = vld [vmem:[%s195 + $0x38] sm:$0xff]
        %v240 = vld [vmem:[%s195 + $0x40] sm:$0xff]
        %v241 = vld [vmem:[%s195 + $0x48] sm:$0xff]
        %v242 = vld [vmem:[%s195 + $0x50] sm:$0xff]
        %v243 = vld [vmem:[%s195 + $0x58] sm:$0xff]
        %v244 = vld [vmem:[%s195 + $0x60] sm:$0xff]
        %v245 = vld [vmem:[%s195 + $0x68] sm:$0xff]
        %v246 = vld [vmem:[%s195 + $0x70] sm:$0xff]
        %v247 = vld [vmem:[%s195 + $0x78] sm:$0xff]
        %v248 = vld [vmem:[%s203] sm:$0xff]
        %vm249 = vcmask 64512
        %v251 = vsel %vm249, %v232, 0
        %v254 = vsel %vm249, %v233, 0
        %v257 = vsel %vm249, %v234, 0
        %v260 = vsel %vm249, %v235, 0
        %v263 = vsel %vm249, %v236, 0
        %v266 = vsel %vm249, %v237, 0
        %v269 = vsel %vm249, %v238, 0
        %v272 = vsel %vm249, %v239, 0
        %v275 = vsel %vm249, %v240, 0
        %v278 = vsel %vm249, %v241, 0
        %v281 = vsel %vm249, %v242, 0
        %v284 = vsel %vm249, %v243, 0
        %v287 = vsel %vm249, %v244, 0
        %v290 = vsel %vm249, %v245, 0
        %v293 = vsel %vm249, %v246, 0
        %v296 = vsel %vm249, %v247, 0
        %298 = vmatpush.msra.mxu0 0.0
        %299 = vmatpush.msra.mxu0 0.0
        %300 = vmatpush.msra.mxu0 0.0
        %301 = vmatpush.msra.mxu0 0.0
        %302 = vmatpush.msra.mxu0 0.0
        %303 = vmatpush.msra.mxu0 0.0
        %304 = vmatpush.msra.mxu0 0.0
        %305 = vmatpush.msra.mxu0 0.0
        %306 = vmatpush.msra.mxu0 0.0
        %307 = vmatpush.msra.mxu0 0.0
        %308 = vmatpush.msra.mxu0 0.0
        %309 = vmatpush.msra.mxu0 0.0
        %310 = vmatpush.msra.mxu0 0.0
        %311 = vmatpush.msra.mxu0 0.0
        %312 = vmatpush.msra.mxu0 0.0
        %313 = vmatpush.msra.mxu0 %v248
        %314 = vmatmul.f32.gmra.mxu0 %v251
        %v315 = vpop.f32.mrf.mxu0
        %v316 = vadd.f32 0.0, %v315
        %317 = vmatmul.f32.gmra.mxu0 %v254
        %v318 = vpop.f32.mrf.mxu0
        %v319 = vadd.f32 0.0, %v318
        %320 = vmatmul.f32.gmra.mxu0 %v257
        %v321 = vpop.f32.mrf.mxu0
        %v322 = vadd.f32 0.0, %v321
        %323 = vmatmul.f32.gmra.mxu0 %v260
        %v324 = vpop.f32.mrf.mxu0
        %v325 = vadd.f32 0.0, %v324
        %326 = vmatmul.f32.gmra.mxu0 %v263
        %v327 = vpop.f32.mrf.mxu0
        %v328 = vadd.f32 0.0, %v327
        %329 = vmatmul.f32.gmra.mxu0 %v266
        %v330 = vpop.f32.mrf.mxu0
        %v331 = vadd.f32 0.0, %v330
        %332 = vmatmul.f32.gmra.mxu0 %v269
        %v333 = vpop.f32.mrf.mxu0
        %v334 = vadd.f32 0.0, %v333
        %335 = vmatmul.f32.gmra.mxu0 %v272
        %v336 = vpop.f32.mrf.mxu0
        %v337 = vadd.f32 0.0, %v336
        %338 = vmatmul.f32.gmra.mxu0 %v275
        %v339 = vpop.f32.mrf.mxu0
        %v340 = vadd.f32 0.0, %v339
        %341 = vmatmul.f32.gmra.mxu0 %v278
        %v342 = vpop.f32.mrf.mxu0
        %v343 = vadd.f32 0.0, %v342
        %344 = vmatmul.f32.gmra.mxu0 %v281
        %v345 = vpop.f32.mrf.mxu0
        %v346 = vadd.f32 0.0, %v345
        %347 = vmatmul.f32.gmra.mxu0 %v284
        %v348 = vpop.f32.mrf.mxu0
        %v349 = vadd.f32 0.0, %v348
        %350 = vmatmul.f32.gmra.mxu0 %v287
        %v351 = vpop.f32.mrf.mxu0
        %v352 = vadd.f32 0.0, %v351
        %353 = vmatmul.f32.gmra.mxu0 %v290
        %v354 = vpop.f32.mrf.mxu0
        %v355 = vadd.f32 0.0, %v354
        %356 = vmatmul.f32.gmra.mxu0 %v293
        %v357 = vpop.f32.mrf.mxu0
        %v358 = vadd.f32 0.0, %v357
        %359 = vmatmul.f32.gmra.mxu0 %v296
        %v360 = vpop.f32.mrf.mxu0
        %v361 = vadd.f32 0.0, %v360
        %362 = vdwg.mxu0
        %v363 = vld [vmem:[#allocation2] sm:$0xff]
        %v364 = vld [vmem:[#allocation2 + $0x8] sm:$0xff]
        %v365 = vld [vmem:[#allocation2 + $0x10] sm:$0xff]
        %v366 = vld [vmem:[#allocation2 + $0x18] sm:$0xff]
        %v367 = vld [vmem:[#allocation2 + $0x20] sm:$0xff]
        %v368 = vld [vmem:[#allocation2 + $0x28] sm:$0xff]
        %v369 = vld [vmem:[#allocation2 + $0x30] sm:$0xff]
        %v370 = vld [vmem:[#allocation2 + $0x38] sm:$0xff]
        %v371 = vld [vmem:[#allocation2 + $0x40] sm:$0xff]
        %v372 = vld [vmem:[#allocation2 + $0x48] sm:$0xff]
        %v373 = vld [vmem:[#allocation2 + $0x50] sm:$0xff]
        %v374 = vld [vmem:[#allocation2 + $0x58] sm:$0xff]
        %v375 = vld [vmem:[#allocation2 + $0x60] sm:$0xff]
        %v376 = vld [vmem:[#allocation2 + $0x68] sm:$0xff]
        %v377 = vld [vmem:[#allocation2 + $0x70] sm:$0xff]
        %v378 = vld [vmem:[#allocation2 + $0x78] sm:$0xff]
        %v379 = vmin.f32 %v363, %v316
        %v380 = vmin.f32 %v364, %v319
        %v381 = vmin.f32 %v365, %v322
        %v382 = vmin.f32 %v366, %v325
        %v383 = vmin.f32 %v367, %v328
        %v384 = vmin.f32 %v368, %v331
        %v385 = vmin.f32 %v369, %v334
        %v386 = vmin.f32 %v370, %v337
        %v387 = vmin.f32 %v371, %v340
        %v388 = vmin.f32 %v372, %v343
        %v389 = vmin.f32 %v373, %v346
        %v390 = vmin.f32 %v374, %v349
        %v391 = vmin.f32 %v375, %v352
        %v392 = vmin.f32 %v376, %v355
        %v393 = vmin.f32 %v377, %v358
        %v394 = vmin.f32 %v378, %v361
        %395 = vst [vmem:[#allocation2] sm:$0xff] %v379
        %396 = vst [vmem:[#allocation2 + $0x8] sm:$0xff] %v380
        %397 = vst [vmem:[#allocation2 + $0x10] sm:$0xff] %v381
        %398 = vst [vmem:[#allocation2 + $0x18] sm:$0xff] %v382
        %399 = vst [vmem:[#allocation2 + $0x20] sm:$0xff] %v383
        %400 = vst [vmem:[#allocation2 + $0x28] sm:$0xff] %v384
        %401 = vst [vmem:[#allocation2 + $0x30] sm:$0xff] %v385
        %402 = vst [vmem:[#allocation2 + $0x38] sm:$0xff] %v386
        %403 = vst [vmem:[#allocation2 + $0x40] sm:$0xff] %v387
        %404 = vst [vmem:[#allocation2 + $0x48] sm:$0xff] %v388
        %405 = vst [vmem:[#allocation2 + $0x50] sm:$0xff] %v389
        %406 = vst [vmem:[#allocation2 + $0x58] sm:$0xff] %v390
        %407 = vst [vmem:[#allocation2 + $0x60] sm:$0xff] %v391
        %408 = vst [vmem:[#allocation2 + $0x68] sm:$0xff] %v392
        %409 = vst [vmem:[#allocation2 + $0x70] sm:$0xff] %v393
        %410 = vst [vmem:[#allocation2 + $0x78] sm:$0xff] %v394
        %s411 = scalar_lea.vmem [#allocation3], %s23
        %v412 = vld [vmem:[%s411] sm:$0x1]
        %v413 = vmin.f32 %v316, %v328
        %v414 = vmin.f32 %v319, %v331
        %v415 = vmin.f32 %v322, %v334
        %v416 = vmin.f32 %v325, %v337
        %v417 = vmin.f32 %v413, %v340
        %v418 = vmin.f32 %v414, %v343
        %v419 = vmin.f32 %v415, %v346
        %v420 = vmin.f32 %v416, %v349
        %v421 = vmin.f32 %v417, %v352
        %v422 = vmin.f32 %v418, %v355
        %v423 = vmin.f32 %v419, %v358
        %v424 = vmin.f32 %v420, %v361
        %v425 = vmin.f32 %v421, %v422
        %v426 = vmin.f32 %v423, %v424
        %v427 = vmin.f32 %v425, %v426
        %v428 = vrot.slane %v427, 4
        %v429 = vmin.f32 %v427, %v428
        %v430 = vrot.slane %v429, 2
        %v431 = vmin.f32 %v429, %v430
        %v432 = vrot.slane %v431, 1
        %v433 = vmin.f32 %v431, %v432
        %v434 = vmin.f32 %v412, %v433
        %435 = vst [vmem:[%s411] sm:$0x1] %v434
        // Predicated region
        $region37: #{tpu_custom_call.1} parent=27 // pred_check
          %p436 = pneg %p205
        $region38: #{tpu_custom_call.1} parent=27 // pred_check_branch
          %438 = sbr.rel (%p436) target = $region40
        $region39: #{tpu_custom_call.1} parent=27 // pred_region
          %v439 = vld [vmem:[#allocation2] sm:$0xff]
          %v440 = vld [vmem:[#allocation2 + $0x8] sm:$0xff]
          %v441 = vld [vmem:[#allocation2 + $0x10] sm:$0xff]
          %v442 = vld [vmem:[#allocation2 + $0x18] sm:$0xff]
          %v443 = vld [vmem:[#allocation2 + $0x20] sm:$0xff]
          %v444 = vld [vmem:[#allocation2 + $0x28] sm:$0xff]
          %v445 = vld [vmem:[#allocation2 + $0x30] sm:$0xff]
          %v446 = vld [vmem:[#allocation2 + $0x38] sm:$0xff]
          %v447 = vld [vmem:[#allocation2 + $0x40] sm:$0xff]
          %v448 = vld [vmem:[#allocation2 + $0x48] sm:$0xff]
          %v449 = vld [vmem:[#allocation2 + $0x50] sm:$0xff]
          %v450 = vld [vmem:[#allocation2 + $0x58] sm:$0xff]
          %v451 = vld [vmem:[#allocation2 + $0x60] sm:$0xff]
          %v452 = vld [vmem:[#allocation2 + $0x68] sm:$0xff]
          %v453 = vld [vmem:[#allocation2 + $0x70] sm:$0xff]
          %v454 = vld [vmem:[#allocation2 + $0x78] sm:$0xff]
          %455 = vmin.xlane.f32.xlu0 %v439
          %v456 = vpop.xlane.xlu0 %455
          %457 = vmin.xlane.f32.xlu0 %v440
          %v458 = vpop.xlane.xlu0 %457
          %459 = vmin.xlane.f32.xlu0 %v441
          %v460 = vpop.xlane.xlu0 %459
          %461 = vmin.xlane.f32.xlu0 %v442
          %v462 = vpop.xlane.xlu0 %461
          %463 = vmin.xlane.f32.xlu0 %v443
          %v464 = vpop.xlane.xlu0 %463
          %465 = vmin.xlane.f32.xlu0 %v444
          %v466 = vpop.xlane.xlu0 %465
          %467 = vmin.xlane.f32.xlu0 %v445
          %v468 = vpop.xlane.xlu0 %467
          %469 = vmin.xlane.f32.xlu0 %v446
          %v470 = vpop.xlane.xlu0 %469
          %471 = vmin.xlane.f32.xlu0 %v447
          %v472 = vpop.xlane.xlu0 %471
          %473 = vmin.xlane.f32.xlu0 %v448
          %v474 = vpop.xlane.xlu0 %473
          %475 = vmin.xlane.f32.xlu0 %v449
          %v476 = vpop.xlane.xlu0 %475
          %477 = vmin.xlane.f32.xlu0 %v450
          %v478 = vpop.xlane.xlu0 %477
          %479 = vmin.xlane.f32.xlu0 %v451
          %v480 = vpop.xlane.xlu0 %479
          %481 = vmin.xlane.f32.xlu0 %v452
          %v482 = vpop.xlane.xlu0 %481
          %483 = vmin.xlane.f32.xlu0 %v453
          %v484 = vpop.xlane.xlu0 %483
          %485 = vmin.xlane.f32.xlu0 %v454
          %v486 = vpop.xlane.xlu0 %485
          %s487 = smul.u32 %s22, 128
          %v488 = vlaneseq
          %v489 = vshrl.u32 %v488, 7
          %v490 = vadd.s32 %v489, 8
          %v491 = vadd.s32 %v489, 16
          %v492 = vadd.s32 %v489, 24
          %v493 = vadd.s32 %v489, 32
          %v494 = vadd.s32 %v489, 40
          %v495 = vadd.s32 %v489, 48
          %v496 = vadd.s32 %v489, 56
          %v497 = vadd.s32 %v489, 64
          %v498 = vadd.s32 %v489, 72
          %v499 = vadd.s32 %v489, 80
          %v500 = vadd.s32 %v489, 88
          %v501 = vadd.s32 %v489, 96
          %v502 = vadd.s32 %v489, 104
          %v503 = vadd.s32 %v489, 112
          %v504 = vadd.s32 %v489, 120
          %v505 = vstv %s487
          %v506 = vadd.s32 %v505, %v489
          %v507 = vadd.s32 %v505, %v490
          %v508 = vadd.s32 %v505, %v491
          %v509 = vadd.s32 %v505, %v492
          %v510 = vadd.s32 %v505, %v493
          %v511 = vadd.s32 %v505, %v494
          %v512 = vadd.s32 %v505, %v495
          %v513 = vadd.s32 %v505, %v496
          %v514 = vadd.s32 %v505, %v497
          %v515 = vadd.s32 %v505, %v498
          %v516 = vadd.s32 %v505, %v499
          %v517 = vadd.s32 %v505, %v500
          %v518 = vadd.s32 %v505, %v501
          %v519 = vadd.s32 %v505, %v502
          %v520 = vadd.s32 %v505, %v503
          %v521 = vadd.s32 %v505, %v504
          %vm522 = vcmp.lt.s32.totalorder %v506, 128
          %vm523 = vcmp.lt.s32.totalorder %v507, 128
          %vm524 = vcmp.lt.s32.totalorder %v508, 128
          %vm525 = vcmp.lt.s32.totalorder %v509, 128
          %vm526 = vcmp.lt.s32.totalorder %v510, 128
          %vm527 = vcmp.lt.s32.totalorder %v511, 128
          %vm528 = vcmp.lt.s32.totalorder %v512, 128
          %vm529 = vcmp.lt.s32.totalorder %v513, 128
          %vm530 = vcmp.lt.s32.totalorder %v514, 128
          %vm531 = vcmp.lt.s32.totalorder %v515, 128
          %vm532 = vcmp.lt.s32.totalorder %v516, 128
          %vm533 = vcmp.lt.s32.totalorder %v517, 128
          %vm534 = vcmp.lt.s32.totalorder %v518, 128
          %vm535 = vcmp.lt.s32.totalorder %v519, 128
          %vm536 = vcmp.lt.s32.totalorder %v520, 128
          %vm537 = vcmp.lt.s32.totalorder %v521, 128
          %v538 = vsel %vm522, %v456, 0.0
          %v539 = vsel %vm523, %v458, 0.0
          %v540 = vsel %vm524, %v460, 0.0
          %v541 = vsel %vm525, %v462, 0.0
          %v542 = vsel %vm526, %v464, 0.0
          %v543 = vsel %vm527, %v466, 0.0
          %v544 = vsel %vm528, %v468, 0.0
          %v545 = vsel %vm529, %v470, 0.0
          %v546 = vsel %vm530, %v472, 0.0
          %v547 = vsel %vm531, %v474, 0.0
          %v548 = vsel %vm532, %v476, 0.0
          %v549 = vsel %vm533, %v478, 0.0
          %v550 = vsel %vm534, %v480, 0.0
          %v551 = vsel %vm535, %v482, 0.0
          %v552 = vsel %vm536, %v484, 0.0
          %v553 = vsel %vm537, %v486, 0.0
          %v554 = vld [vmem:[#allocation5] sm:$0x1]
          %v555 = vadd.f32 %v538, %v539
          %v556 = vadd.f32 %v555, %v540
          %v557 = vadd.f32 %v556, %v541
          %v558 = vadd.f32 %v557, %v542
          %v559 = vadd.f32 %v558, %v543
          %v560 = vadd.f32 %v559, %v544
          %v561 = vadd.f32 %v560, %v545
          %v562 = vadd.f32 %v561, %v546
          %v563 = vadd.f32 %v562, %v547
          %v564 = vadd.f32 %v563, %v548
          %v565 = vadd.f32 %v564, %v549
          %v566 = vadd.f32 %v565, %v550
          %v567 = vadd.f32 %v566, %v551
          %v568 = vadd.f32 %v567, %v552
          %v569 = vadd.f32 %v568, %v553
          %v570 = vrot.slane %v569, 4
          %v571 = vadd.f32 %v569, %v570
          %v572 = vrot.slane %v571, 2
          %v573 = vadd.f32 %v571, %v572
          %v574 = vrot.slane %v573, 1
          %v575 = vadd.f32 %v573, %v574
          %v576 = vadd.f32 %v554, %v575
          %577 = vst [vmem:[#allocation5] sm:$0x1] %v576
        $region40: #{tpu_custom_call.1} parent=27 // pred_fallthru
          _
        // Predicated region
        $region41: #{tpu_custom_call.1} parent=27 // pred_check
          %p578 = pneg %p204
        $region42: #{tpu_custom_call.1} parent=27 // pred_check_branch
          %580 = sbr.rel (%p578) target = $region44
        $region43: #{tpu_custom_call.1} parent=27 // pred_region
          %s581 = smul.u32 %s23, 128
          %v582 = vlaneseq
          %v583 = vand.u32 %v582, 127
          %v584 = vstv %s581
          %v585 = vadd.s32 %v584, %v583
          %vm586 = vcmp.lt.s32.totalorder %v585, 96
          %v587 = vld [vmem:[%s411] sm:$0x1]
          %v588 = vsel %vm586, %v587, 0.0
          %v589 = vld [vmem:[#allocation4] sm:$0x1]
          %vm590 = vcmask 1040384
          %v591 = vsel %vm590, %v588, 0.0
          %592 = vadd.xlane.f32.xlu0 %v591
          %v593 = vpop.xlane.xlu0 %592
          %v594 = vadd.f32 %v589, %v593
          %595 = vst [vmem:[#allocation4] sm:$0x1] %v594
        $region44: #{tpu_custom_call.1} parent=27 // pred_fallthru
          _
        // Predicated region
        $region45: #{tpu_custom_call.1} parent=27 // pred_check
          _
        $region46: #{tpu_custom_call.1} parent=27 // pred_check_branch
          %597 = sbr.rel (%p206) target = $region48
        $region47: #{tpu_custom_call.1} parent=27 // pred_region
          %v598 = vlaneseq
          %v599 = vand.u32 %v598, 127
          %v600 = vld [vmem:[#allocation4] sm:$0x1]
          %v601 = vmul.f32 %v600, 0.020833334
          %v602 = vld [vmem:[#allocation5] sm:$0x1]
          %v603 = vmul.f32 %v602, 0.015625
          %vm604 = vcmp.eq.s32.totalorder %v599, 0
          %vm605 = vcmp.eq.s32.totalorder %v599, 1
          %v606 = vsel %vm605, %v603, 0.0
          %v607 = vsel %vm604, %v601, %v606
          %608 = vst [vmem:[%s186] sm:$0x1] %v607
        $region48: #{tpu_custom_call.1} parent=27 // pred_fallthru
          _
        %s609 = sand.u32 %s99, 1
        %s610 = scalar_lea.sflag [#allocation7], %s609
        %s611 = sand.u32 %s99, 1
        %s612 = scalar_lea.vmem [#allocation6], %s611
        // Predicated region
        $region49: #{tpu_custom_call.1} parent=27 // pred_check
          %p613 = pneg %p109
        $region50: #{tpu_custom_call.1} parent=27 // pred_check_branch
          %615 = sbr.rel (%p613) target = $region52
        $region51: #{tpu_custom_call.1} parent=27 // pred_region
          %617 = vsyncadd %s610, 0
          %s618 = scalar_lea.hbm %s2, %s21
          %s620 = sshll.u32 %s612, 4
          %s621 = int_to_ptr.vmem [resolvable:$true] %s620
          %s622 = sshll.u32 %s618, 4
          %s623 = int_to_ptr.hbm [resolvable:$true] %s622
          %625 = dma.vmem_to_hbm [thread:$0]  %s621, 16, %s623, %s610
        $region52: #{tpu_custom_call.1} parent=27 // pred_fallthru
          _
      $region28: #{tpu_custom_call.1} parent=5 // pred_fallthru
        _
      %p626 = scmp.le.s32.totalorder 2, %s11
      // Predicated region
      $region53: #{tpu_custom_call.1} parent=5 // pred_check
        %p627 = pneg %p626
      $region54: #{tpu_custom_call.1} parent=5 // pred_check_branch
        %629 = sbr.rel (%p627) target = $region56
      $region55: #{tpu_custom_call.1} parent=5 // pred_region
        %s630 = ssub.s32 %s11, 2
        // Predicated region
        $region57: #{tpu_custom_call.1} parent=55 // pred_check
          %p631 = pneg %p115
        $region58: #{tpu_custom_call.1} parent=55 // pred_check_branch
          %633 = sbr.rel (%p631) target = $region60
        $region59: #{tpu_custom_call.1} parent=55 // pred_region
          %s634 = sand.u32 %s100, 1
          %s635 = scalar_lea.sflag [#allocation7], %s634
          %s636 = sand.u32 %s100, 1
          %s637 = scalar_lea.vmem [#allocation6], %s636
          %639 = dma.done %s635, 16
        $region60: #{tpu_custom_call.1} parent=55 // pred_fallthru
          _
      $region56: #{tpu_custom_call.1} parent=5 // pred_fallthru
        _
    $region6: #{tpu_custom_call.1} parent=1 // loop_footer
      %s15 = sadd.s32 1, %s11
    $region7: #{tpu_custom_call.1} parent=1 // loop_footer_branch
      %10 = sbr.rel target = $region3
    $region8: #{tpu_custom_call.1} parent=1 // loop_exit
      _
    %640 = vsyncpa [#allocation7], 1
    %s641 = scalar_lea.sflag [#allocation7], 1
    %642 = vsyncpa %s641, 1

</llo_original>
